<compile_context>
chip_gen: v7x
topology: tpu7x:2x2x1
jax: 0.10.0
libtpu: 0.0.40
codegen_flags: <defaults>
</compile_context>

<pallas_src>
import jax
import jax.numpy as jnp
from jax import lax
from jax.experimental import pallas as pl
from jax.experimental.pallas import tpu as pltpu


def _round_up(v, m):
    return -(-v // m) * m


# ------------------------------- Pallas kernel ------------------------------ #

def _stem_fused_kernel(p_ref, h_ref, w_ref, o_ref, y_sc, yh_sc):
    """Fused conv(7x7/s2)+foldedBN+ReLU+maxpool(3x3/s2) for one pooled-row block.

    p_ref : (1, 2*BHP*WP2P, K1) bf16  main block: 2*BHP conv rows, each row's
            WP2P pool-padded conv cols laid out [even plane | odd plane | 0pad]
            (even-plane j = pool-padded col 2j, odd-plane j = pool-padded 2j+1).
    h_ref : (1, WP2P, K1)       bf16  halo conv row shared with the next block.
    w_ref : (K1, C)             bf16  BN scale folded in; bias = last row
                                      (driven by the ones column of the patches).
    o_ref : (1, BHP, WP, C)     f32   pooled output rows of this block.
    y_sc  : (2*BHP*WP2P, C)     f32   conv+BN+ReLU of the main block.
    yh_sc : (WP2P, C)           f32   conv+BN+ReLU of the halo row.
    """
    _, BHP, WP, _ = o_ref.shape
    WP2P = h_ref.shape[1]
    OD = _round_up(WP + 1, 8)          # static, sublane-aligned odd-plane offset

    w = w_ref[...]                     # hoisted, reused by both dots
    # One fused MXU matmul for all conv rows of the block.
    y_sc[...] = jnp.maximum(
        jnp.dot(p_ref[0], w, preferred_element_type=jnp.float32), 0.0)
    # Tiny matmul for the single halo row shared with the next block.
    yh_sc[...] = jnp.maximum(
        jnp.dot(h_ref[0], w, preferred_element_type=jnp.float32), 0.0)

    # 3x3/s2 max pool, done separably: height max over conv rows {2h,2h+1,2h+2}
    # of the block, then width max over pool-padded cols {2j,2j+1,2j+2} via the
    # contiguous even/odd plane slices.  BHP is small (<=~28) -> static unroll.
    for h in range(BHP):
        r0 = y_sc[pl.ds((2 * h) * WP2P, WP2P), :]
        r1 = y_sc[pl.ds((2 * h + 1) * WP2P, WP2P), :]
        r2 = (y_sc[pl.ds((2 * h + 2) * WP2P, WP2P), :]
              if h + 1 < BHP else yh_sc[...])
        rm = jnp.maximum(jnp.maximum(r0, r1), r2)              # (WP2P, C)
        o_ref[0, h] = jnp.maximum(jnp.maximum(rm[:WP], rm[OD:OD + WP]),
                                  rm[1:WP + 1])


def _fused_stem_call(patches, w_aug, bhp, jb, wp, cout):
    n, _, k1 = patches.shape
    wp2p = w_aug.shape[0] * 0 + patches.shape[1] // 1  # placeholder (re-set below)
    # patches is (N, rows_pad*wp2p, K1); recover wp2p from static metadata:
    # (passed implicitly via the halo block shape) -- compute it here instead.
    # NOTE: rows_pad = 2*bhp*jb + 1, so:
    wp2p = patches.shape[1] // (2 * bhp * jb + 1)
    rb = 2 * bhp

    flops = 2 * n * jb * (rb + 1) * wp2p * k1 * cout
    bytes_accessed = (n * jb * (rb + 1) * wp2p * k1 * patches.dtype.itemsize
                      + n * jb * k1 * cout * w_aug.dtype.itemsize
                      + n * jb * bhp * wp * cout * 4)

    return pl.pallas_call(
        _stem_fused_kernel,
        out_shape=jax.ShapeDtypeStruct((n, jb * bhp, wp, cout), jnp.float32),
        grid_spec=pltpu.PrefetchScalarGridSpec(
            num_scalar_prefetch=0,
            grid=(n, jb),
            in_specs=[
                # main block: 2*bhp conv rows (flattened rows*cols on dim 1)
                pl.BlockSpec((1, rb * wp2p, k1), lambda ni, j: (ni, j, 0)),
                # halo row: first conv row of the NEXT block, same array
                pl.BlockSpec((1, wp2p, k1),
                             lambda ni, j: (ni, rb * (j + 1), 0)),
                # folded weights, resident across the whole grid
                pl.BlockSpec((k1, cout), lambda ni, j: (0, 0)),
            ],
            out_specs=pl.BlockSpec((1, bhp, wp, cout),
                                   lambda ni, j: (ni, j, 0, 0)),
            scratch_shapes=[
                pltpu.VMEM((rb * wp2p, cout), jnp.float32),
                pltpu.VMEM((wp2p, cout), jnp.float32),
            ],
        ),
        compiler_params=pltpu.CompilerParams(
            dimension_semantics=("parallel", "parallel")),   # megacore-friendly
        cost_estimate=pl.CostEstimate(flops=flops, transcendentals=0,
                                      bytes_accessed=bytes_accessed),
    )(patches, patches, w_aug)


# --------------------------- full stem (visible_moduleA) -------------------- #

def resnet_stem(x_nchw, conv_w, scale, bias):
    """conv1(7x7,s2,p3) -> bn1 (folded, eval) -> relu -> maxpool(3x3,s2,p1)."""
    N, Cin, H, W = x_nchw.shape
    Cout = conv_w.shape[0]

    Ho = (H - 1) // 2 + 1
    Wo = (W - 1) // 2 + 1
    Hp = (Ho - 1) // 2 + 1
    Wp = (Wo - 1) // 2 + 1
    n_odd = Wo - Wp                       # number of odd conv cols (W >= 3)

    K = 49 * Cin
    K1 = K + 1                            # + ones column driving the bias row
    od_off = _round_up(Wp + 1, 8)         # odd plane start (sublane aligned)
    wp2p = _round_up(od_off + Wp, 16)     # padded col count (bf16-tile aligned)

    # pooled-row block size: target ~4K matmul rows per grid step, but keep
    # >=2 row blocks per image so both v7x TensorCores get work even at N=1.
    bhp = max(1, min((Hp + 1) // 2, max(1, (4096 // wp2p - 1) // 2)))
    jb = -(-Hp // bhp)                    # cdiv(Hp, bhp): row blocks per image
    rows_pad = 2 * bhp * jb + 1           # top pool-pad row + conv rows + pad

    # ---- glue (layout plumbing only): bf16 im2col straight into the kernel
    # layout; all conv/BN/ReLU/pool math happens inside the kernel. ----------
    # TODO(synk): building the patches inside the kernel (DMA of raw input row
    # strips + in-VMEM tap assembly) would remove this HBM-materialized im2col
    # tensor entirely -- the main remaining lever for bandwidth-bound v5e.
    x = jnp.transpose(x_nchw, (0, 2, 3, 1)).astype(jnp.bfloat16)   # NHWC bf16
    x_pad = jnp.pad(x, ((0, 0), (3, 3), (3, 3), (0, 0)))

    # even/odd conv-column planes built directly from strided slices
    # (folds the stride-2 width downsample; no post-hoc permute gather).
    od_taps, ev_taps = [], []
    for kh in range(7):
        for kw in range(7):
            rows = x_pad[:, kh:kh + 2 * Ho - 1:2, :, :]
            od_taps.append(rows[:, :, kw:kw + 4 * (Wp - 1) + 1:4, :])
            ev_taps.append(rows[:, :, kw + 2:kw + 2 + 4 * (n_odd - 1) + 1:4, :])
    od_p = jnp.stack(od_taps, axis=3).reshape(N, Ho, Wp, K)     # conv cols 0,2,..
    ev_p = jnp.stack(ev_taps, axis=3).reshape(N, Ho, n_odd, K)  # conv cols 1,3,..
    od_p = jnp.concatenate([od_p, jnp.ones((N, Ho, Wp, 1), od_p.dtype)], -1)
    ev_p = jnp.concatenate([ev_p, jnp.ones((N, Ho, n_odd, 1), ev_p.dtype)], -1)

    # Zero padding rows/cols (zero ones-column => conv+bias = 0 => ReLU 0 =>
    # pool-neutral, since ReLU precedes the maxpool and every 3x3 window holds
    # at least one real value >= 0).
    pad_bot = rows_pad - 1 - Ho
    ev_f = jnp.pad(ev_p, ((0, 0), (1, pad_bot), (1, od_off - 1 - n_odd), (0, 0)))
    od_f = jnp.pad(od_p, ((0, 0), (1, pad_bot), (0, wp2p - od_off - Wp), (0, 0)))
    patches = jnp.concatenate([ev_f, od_f], axis=2)     # (N, rows_pad, wp2p, K1)
    patches = patches.reshape(N, rows_pad * wp2p, K1)   # flat rows -> no kernel reshape

    # weights: OIHW -> (KH,KW,I,O) -> (K,Cout); fold BN scale; bias as last row.
    w2d = jnp.transpose(conv_w, (2, 3, 1, 0)).reshape(K, Cout) * scale[None, :]
    w_aug = jnp.concatenate([w2d, bias[None, :]], axis=0).astype(jnp.bfloat16)

    out = _fused_stem_call(patches, w_aug, bhp, jb, Wp, Cout)   # (N, jb*bhp, Wp, C)
    out = out[:, :Hp]                                   # drop block padding rows
    return jnp.transpose(out, (0, 3, 1, 2))             # back to NCHW


# ------------------------------ pure-JAX reference -------------------------- #

def reference_stem(x_nchw, conv_w, scale, bias):
    x = jnp.transpose(x_nchw, (0, 2, 3, 1))
    w = jnp.transpose(conv_w, (2, 3, 1, 0))             # HWIO
    y = lax.conv_general_dilated(
        x, w, window_strides=(2, 2), padding=((3, 3), (3, 3)),
        dimension_numbers=("NHWC", "HWIO", "NHWC"))
    y = jnp.maximum(y * scale + bias, 0.0)
    y = lax.reduce_window(y, -jnp.inf, lax.max,
                          window_dimensions=(1, 3, 3, 1),
                          window_strides=(1, 2, 2, 1),
                          padding=((0, 0), (1, 1), (1, 1), (0, 0)))
    return jnp.transpose(y, (0, 3, 1, 2))


# ----------------------------------- main ----------------------------------- #

if __name__ == "__main__":
    key = jax.random.PRNGKey(0)
    k1, k2, k3, k4, k5, k6 = jax.random.split(key, 6)

    N, Cin, H, W = 2, 3, 32, 32
    Cout = 64

    x = jax.random.normal(k1, (N, Cin, H, W), jnp.float32)

    # Deterministic synthetic parameters (shapes from the ResNet-50 stem).
    # TODO(synk): pretrained=True checkpoint load has no in-script equivalent.
    conv_w = 0.05 * jax.random.normal(k2, (Cout, Cin, 7, 7), jnp.float32)
    gamma = 1.0 + 0.1 * jax.random.normal(k3, (Cout,), jnp.float32)
    beta = 0.1 * jax.random.normal(k4, (Cout,), jnp.float32)
    running_mean = 0.1 * jax.random.normal(k5, (Cout,), jnp.float32)
    running_var = jnp.abs(jax.random.normal(k6, (Cout,), jnp.float32)) + 0.5
    eps = 1e-5
    # Fold eval-mode BatchNorm into per-channel scale/bias.
    scale = gamma / jnp.sqrt(running_var + eps)
    bias = beta - running_mean * scale

    out = jax.jit(resnet_stem)(x, conv_w, scale, bias)
    out = jax.block_until_ready(out)

    ref = reference_stem(x, conv_w, scale, bias)
    if out.shape != (N, Cout, 8, 8):
        raise AssertionError(f"unexpected output shape {out.shape}")
    # bf16 input/weight streaming (f32 MXU accumulation) -> slightly looser tol.
    if not jnp.allclose(out, ref, atol=2e-2, rtol=2e-2):
        raise AssertionError("kernel output mismatch vs JAX reference")

    print("KERNEL_OK")
</pallas_src>

<mosaic_0001>
module attributes {stable_mosaic.version = 11 : i64} {
  func.func @_stem_fused_kernel(%arg0: i32, %arg1: i32, %arg2: memref<1x256x148xbf16, #tpu.memory_space<vmem>>, %arg3: memref<1x32x148xbf16, #tpu.memory_space<vmem>>, %arg4: memref<148x64xbf16, #tpu.memory_space<vmem>>, %arg5: memref<1x4x8x64xf32, #tpu.memory_space<vmem>>, %arg6: memref<256x64xf32, #tpu.memory_space<vmem>>, %arg7: memref<32x64xf32, #tpu.memory_space<vmem>>) attributes {dimension_semantics = [#tpu.dimension_semantics<parallel>, #tpu.dimension_semantics<parallel>], iteration_bounds = array<i64: 2, 2>, scalar_prefetch = 0 : i64, scratch_operands = 2 : i64, tpu.core_type = #tpu.core_type<tc>, window_params = [{transform_indices = @transform_0, window_bounds = array<i64: 1, 256, 148>}, {transform_indices = @transform_1, window_bounds = array<i64: 1, 32, 148>}, {pipeline_mode = #tpu.pipeline_mode<synchronous>, transform_indices = @transform_2, window_bounds = array<i64: 148, 64>}, {transform_indices = @transform_3, window_bounds = array<i64: 1, 4, 8, 64>}]} {
    %c0 = arith.constant 0 : index
    %c0_0 = arith.constant 0 : index
    %0 = vector.load %arg4[%c0, %c0_0] : memref<148x64xbf16, #tpu.memory_space<vmem>>, vector<148x64xbf16>
    %c0_1 = arith.constant 0 : index
    %c0_2 = arith.constant 0 : index
    %c0_3 = arith.constant 0 : index
    %1 = vector.load %arg2[%c0_1, %c0_2, %c0_3] : memref<1x256x148xbf16, #tpu.memory_space<vmem>>, vector<1x256x148xbf16>
    %2 = vector.shape_cast %1 : vector<1x256x148xbf16> to vector<256x148xbf16>
    %cst = arith.constant dense<0.000000e+00> : vector<256x64xf32>
    %3 = tpu.matmul %2, %0, %cst {dimension_numbers = #tpu.dot_dimension_numbers<[1], [0], [0], [1], [0, 0, 1, 1], [], []>} : vector<256x148xbf16>, vector<148x64xbf16>, vector<256x64xf32> -> vector<256x64xf32>
    %cst_4 = arith.constant 0.000000e+00 : f32
    %4 = vector.broadcast %cst_4 : f32 to vector<256x64xf32>
    %5 = arith.maximumf %3, %4 : vector<256x64xf32>
    %c0_5 = arith.constant 0 : index
    %c0_6 = arith.constant 0 : index
    %6 = vector.load %arg6[%c0_5, %c0_6] : memref<256x64xf32, #tpu.memory_space<vmem>>, vector<256x64xf32>
    tpu.vector_store %arg6[%c0_5, %c0_6], %5 {strides = array<i32>} : memref<256x64xf32, #tpu.memory_space<vmem>>, vector<256x64xf32>,
    %c0_7 = arith.constant 0 : index
    %c0_8 = arith.constant 0 : index
    %c0_9 = arith.constant 0 : index
    %7 = vector.load %arg3[%c0_7, %c0_8, %c0_9] : memref<1x32x148xbf16, #tpu.memory_space<vmem>>, vector<1x32x148xbf16>
    %8 = vector.shape_cast %7 : vector<1x32x148xbf16> to vector<32x148xbf16>
    %cst_10 = arith.constant dense<0.000000e+00> : vector<32x64xf32>
    %9 = tpu.matmul %8, %0, %cst_10 {dimension_numbers = #tpu.dot_dimension_numbers<[1], [0], [0], [1], [0, 0, 1, 1], [], []>} : vector<32x148xbf16>, vector<148x64xbf16>, vector<32x64xf32> -> vector<32x64xf32>
    %cst_11 = arith.constant 0.000000e+00 : f32
    %10 = vector.broadcast %cst_11 : f32 to vector<32x64xf32>
    %11 = arith.maximumf %9, %10 : vector<32x64xf32>
    %c0_12 = arith.constant 0 : index
    %c0_13 = arith.constant 0 : index
    %12 = vector.load %arg7[%c0_12, %c0_13] : memref<32x64xf32, #tpu.memory_space<vmem>>, vector<32x64xf32>
    tpu.vector_store %arg7[%c0_12, %c0_13], %11 {strides = array<i32>} : memref<32x64xf32, #tpu.memory_space<vmem>>, vector<32x64xf32>,
    %c0_14 = arith.constant 0 : index
    %c0_15 = arith.constant 0 : index
    %13 = vector.load %arg6[%c0_14, %c0_15] : memref<256x64xf32, #tpu.memory_space<vmem>>, vector<32x64xf32>
    %c32 = arith.constant 32 : index
    %c0_16 = arith.constant 0 : index
    %14 = vector.load %arg6[%c32, %c0_16] : memref<256x64xf32, #tpu.memory_space<vmem>>, vector<32x64xf32>
    %c64 = arith.constant 64 : index
    %c0_17 = arith.constant 0 : index
    %15 = vector.load %arg6[%c64, %c0_17] : memref<256x64xf32, #tpu.memory_space<vmem>>, vector<32x64xf32>
    %16 = arith.maximumf %13, %14 : vector<32x64xf32>
    %17 = arith.maximumf %16, %15 : vector<32x64xf32>
    %18 = vector.extract_strided_slice %17 {offsets = [0, 0], sizes = [8, 64], strides = [1, 1]} : vector<32x64xf32> to vector<8x64xf32>
    %19 = vector.extract_strided_slice %17 {offsets = [16, 0], sizes = [8, 64], strides = [1, 1]} : vector<32x64xf32> to vector<8x64xf32>
    %20 = arith.maximumf %18, %19 : vector<8x64xf32>
    %21 = vector.extract_strided_slice %17 {offsets = [1, 0], sizes = [8, 64], strides = [1, 1]} : vector<32x64xf32> to vector<8x64xf32>
    %22 = arith.maximumf %20, %21 : vector<8x64xf32>
    %c0_18 = arith.constant 0 : index
    %c0_19 = arith.constant 0 : index
    %c0_20 = arith.constant 0 : index
    %c0_21 = arith.constant 0 : index
    %23 = vector.load %arg5[%c0_18, %c0_19, %c0_20, %c0_21] : memref<1x4x8x64xf32, #tpu.memory_space<vmem>>, vector<1x1x8x64xf32>
    %24 = vector.shape_cast %23 : vector<1x1x8x64xf32> to vector<8x64xf32>
    %25 = vector.shape_cast %22 : vector<8x64xf32> to vector<1x1x8x64xf32>
    tpu.vector_store %arg5[%c0_18, %c0_19, %c0_20, %c0_21], %25 {strides = array<i32>} : memref<1x4x8x64xf32, #tpu.memory_space<vmem>>, vector<1x1x8x64xf32>,
    %c64_22 = arith.constant 64 : index
    %c0_23 = arith.constant 0 : index
    %26 = vector.load %arg6[%c64_22, %c0_23] : memref<256x64xf32, #tpu.memory_space<vmem>>, vector<32x64xf32>
    %c96 = arith.constant 96 : index
    %c0_24 = arith.constant 0 : index
    %27 = vector.load %arg6[%c96, %c0_24] : memref<256x64xf32, #tpu.memory_space<vmem>>, vector<32x64xf32>
    %c128 = arith.constant 128 : index
    %c0_25 = arith.constant 0 : index
    %28 = vector.load %arg6[%c128, %c0_25] : memref<256x64xf32, #tpu.memory_space<vmem>>, vector<32x64xf32>
    %29 = arith.maximumf %26, %27 : vector<32x64xf32>
    %30 = arith.maximumf %29, %28 : vector<32x64xf32>
    %31 = vector.extract_strided_slice %30 {offsets = [0, 0], sizes = [8, 64], strides = [1, 1]} : vector<32x64xf32> to vector<8x64xf32>
    %32 = vector.extract_strided_slice %30 {offsets = [16, 0], sizes = [8, 64], strides = [1, 1]} : vector<32x64xf32> to vector<8x64xf32>
    %33 = arith.maximumf %31, %32 : vector<8x64xf32>
    %34 = vector.extract_strided_slice %30 {offsets = [1, 0], sizes = [8, 64], strides = [1, 1]} : vector<32x64xf32> to vector<8x64xf32>
    %35 = arith.maximumf %33, %34 : vector<8x64xf32>
    %c0_26 = arith.constant 0 : index
    %c1 = arith.constant 1 : index
    %c0_27 = arith.constant 0 : index
    %c0_28 = arith.constant 0 : index
    %36 = vector.load %arg5[%c0_26, %c1, %c0_27, %c0_28] : memref<1x4x8x64xf32, #tpu.memory_space<vmem>>, vector<1x1x8x64xf32>
    %37 = vector.shape_cast %36 : vector<1x1x8x64xf32> to vector<8x64xf32>
    %38 = vector.shape_cast %35 : vector<8x64xf32> to vector<1x1x8x64xf32>
    tpu.vector_store %arg5[%c0_26, %c1, %c0_27, %c0_28], %38 {strides = array<i32>} : memref<1x4x8x64xf32, #tpu.memory_space<vmem>>, vector<1x1x8x64xf32>,
    %c128_29 = arith.constant 128 : index
    %c0_30 = arith.constant 0 : index
    %39 = vector.load %arg6[%c128_29, %c0_30] : memref<256x64xf32, #tpu.memory_space<vmem>>, vector<32x64xf32>
    %c160 = arith.constant 160 : index
    %c0_31 = arith.constant 0 : index
    %40 = vector.load %arg6[%c160, %c0_31] : memref<256x64xf32, #tpu.memory_space<vmem>>, vector<32x64xf32>
    %c192 = arith.constant 192 : index
    %c0_32 = arith.constant 0 : index
    %41 = vector.load %arg6[%c192, %c0_32] : memref<256x64xf32, #tpu.memory_space<vmem>>, vector<32x64xf32>
    %42 = arith.maximumf %39, %40 : vector<32x64xf32>
    %43 = arith.maximumf %42, %41 : vector<32x64xf32>
    %44 = vector.extract_strided_slice %43 {offsets = [0, 0], sizes = [8, 64], strides = [1, 1]} : vector<32x64xf32> to vector<8x64xf32>
    %45 = vector.extract_strided_slice %43 {offsets = [16, 0], sizes = [8, 64], strides = [1, 1]} : vector<32x64xf32> to vector<8x64xf32>
    %46 = arith.maximumf %44, %45 : vector<8x64xf32>
    %47 = vector.extract_strided_slice %43 {offsets = [1, 0], sizes = [8, 64], strides = [1, 1]} : vector<32x64xf32> to vector<8x64xf32>
    %48 = arith.maximumf %46, %47 : vector<8x64xf32>
    %c0_33 = arith.constant 0 : index
    %c2 = arith.constant 2 : index
    %c0_34 = arith.constant 0 : index
    %c0_35 = arith.constant 0 : index
    %49 = vector.load %arg5[%c0_33, %c2, %c0_34, %c0_35] : memref<1x4x8x64xf32, #tpu.memory_space<vmem>>, vector<1x1x8x64xf32>
    %50 = vector.shape_cast %49 : vector<1x1x8x64xf32> to vector<8x64xf32>
    %51 = vector.shape_cast %48 : vector<8x64xf32> to vector<1x1x8x64xf32>
    tpu.vector_store %arg5[%c0_33, %c2, %c0_34, %c0_35], %51 {strides = array<i32>} : memref<1x4x8x64xf32, #tpu.memory_space<vmem>>, vector<1x1x8x64xf32>,
    %c192_36 = arith.constant 192 : index
    %c0_37 = arith.constant 0 : index
    %52 = vector.load %arg6[%c192_36, %c0_37] : memref<256x64xf32, #tpu.memory_space<vmem>>, vector<32x64xf32>
    %c224 = arith.constant 224 : index
    %c0_38 = arith.constant 0 : index
    %53 = vector.load %arg6[%c224, %c0_38] : memref<256x64xf32, #tpu.memory_space<vmem>>, vector<32x64xf32>
    %c0_39 = arith.constant 0 : index
    %c0_40 = arith.constant 0 : index
    %54 = vector.load %arg7[%c0_39, %c0_40] : memref<32x64xf32, #tpu.memory_space<vmem>>, vector<32x64xf32>
    %55 = arith.maximumf %52, %53 : vector<32x64xf32>
    %56 = arith.maximumf %55, %54 : vector<32x64xf32>
    %57 = vector.extract_strided_slice %56 {offsets = [0, 0], sizes = [8, 64], strides = [1, 1]} : vector<32x64xf32> to vector<8x64xf32>
    %58 = vector.extract_strided_slice %56 {offsets = [16, 0], sizes = [8, 64], strides = [1, 1]} : vector<32x64xf32> to vector<8x64xf32>
    %59 = arith.maximumf %57, %58 : vector<8x64xf32>
    %60 = vector.extract_strided_slice %56 {offsets = [1, 0], sizes = [8, 64], strides = [1, 1]} : vector<32x64xf32> to vector<8x64xf32>
    %61 = arith.maximumf %59, %60 : vector<8x64xf32>
    %c0_41 = arith.constant 0 : index
    %c3 = arith.constant 3 : index
    %c0_42 = arith.constant 0 : index
    %c0_43 = arith.constant 0 : index
    %62 = vector.load %arg5[%c0_41, %c3, %c0_42, %c0_43] : memref<1x4x8x64xf32, #tpu.memory_space<vmem>>, vector<1x1x8x64xf32>
    %63 = vector.shape_cast %62 : vector<1x1x8x64xf32> to vector<8x64xf32>
    %64 = vector.shape_cast %61 : vector<8x64xf32> to vector<1x1x8x64xf32>
    tpu.vector_store %arg5[%c0_41, %c3, %c0_42, %c0_43], %64 {strides = array<i32>} : memref<1x4x8x64xf32, #tpu.memory_space<vmem>>, vector<1x1x8x64xf32>,
    return
  }
  func.func @transform_0(%arg0: i32, %arg1: i32) -> (i32, i32, i32) {
    %c0_i32 = arith.constant 0 : i32
    %c0_i32_0 = arith.constant 0 : i32
    return %arg0, %arg1, %c0_i32 : i32, i32, i32
  }
  func.func @transform_1(%arg0: i32, %arg1: i32) -> (i32, i32, i32) {
    %c1_i32 = arith.constant 1 : i32
    %0 = arith.addi %arg1, %c1_i32 : i32
    %c8_i32 = arith.constant 8 : i32
    %1 = arith.muli %c8_i32, %0 : i32
    %c0_i32 = arith.constant 0 : i32
    %c0_i32_0 = arith.constant 0 : i32
    return %arg0, %1, %c0_i32 : i32, i32, i32
  }
  func.func @transform_2(%arg0: i32, %arg1: i32) -> (i32, i32) {
    %c0_i32 = arith.constant 0 : i32
    %c0_i32_0 = arith.constant 0 : i32
    %c0_i32_1 = arith.constant 0 : i32
    return %c0_i32, %c0_i32_0 : i32, i32
  }
  func.func @transform_3(%arg0: i32, %arg1: i32) -> (i32, i32, i32, i32) {
    %c0_i32 = arith.constant 0 : i32
    %c0_i32_0 = arith.constant 0 : i32
    %c0_i32_1 = arith.constant 0 : i32
    return %arg0, %arg1, %c0_i32, %c0_i32_0 : i32, i32, i32, i32
  }
}

</mosaic_0001>

<llo_original>
// kernel: resnet_stem.1
$region0: #{resnet_stem.1}
  #allocation0 [shape = 'u32[]', space=smem, size = 0x4, offset = 0x4, fixed_abs, tag = 'smem constant byte address 0x4 - core index']
  #allocation1 [shape = 'u32[144,128]{1,0:T(1,128)}', space=vmem, size = 0x12000, scoped, tag = 'internal scratch']
  #allocation2 [shape = 'f32[256,64]{1,0:T(8,128)}', space=vmem, size = 0x20000, scoped, tag = 'scratch operand']
  #allocation3 [shape = 'f32[32,64]{1,0:T(8,128)}', space=vmem, size = 0x4000, scoped, tag = 'scratch operand']
  %s0 = inlined_call_operand.vmem [shape: bf16[2,544,148], index: 0, kind: input, shape index: {}, may-alias: {0,1}]
  %s1 = inlined_call_operand.vmem [shape: bf16[2,544,148], index: 1, kind: input, shape index: {}, may-alias: {0,1}]
  %s2 = inlined_call_operand.vmem [shape: bf16[148,64], index: 2, kind: input, shape index: {}]
  %s3 = inlined_call_operand.hbm [shape: f32[2,8,8,64], index: 3, kind: output, shape index: {}]
  %s4 = sld [smem:[#allocation0]]
  $region45: #{resnet_stem.1} parent=0
    _
  %s6 = ssub.s32 1, %s4
  %s7 = scalar_select 0, %s6, %s4
  $region1: #{resnet_stem.1} parent=0
    #allocation4 [shape = 'u8[32768]{0}', space=vmem, size = 0x8000, scoped, tag = 'output window, operand 0']
    #allocation5 [shape = 's32[2]{0}', space=sflag, size = 0x8, scoped, tag = 'scoped memory for resnet_stem.1']
    %8 = vsyncpa [#allocation5], 0
    %s9 = scalar_lea.sflag [#allocation5], 1
    %10 = vsyncpa %s9, 0
    loop: start=0, step=1, limit=6
    $region2: #{resnet_stem.1} parent=1 // loop_pre_header
      _
    $region3: #{resnet_stem.1} parent=1 // loop_header
      %s12 = sphi 0, %s16
      %p13 = scmp.ge.s32.totalorder %s12, 6
      %s19 = sphi 0, %s31
      %s20 = sphi 0, %s27
      %s21 = sphi 0, %s19
      %s22 = sphi 0, %s20
      %s23 = sphi 0, %s21
      %s24 = sphi 0, %s22
      %s36 = sphi 0, %s38
      %s39 = sphi 0, %s36
      %s40 = sphi 0, %s39
      %s56 = sphi 0, %s40
      %s68 = sphi 0, %s70
      %s71 = sphi 0, %s68
      %s72 = sphi 0, %s71
      %s88 = sphi 0, %s72
      %s92 = sphi 0, %s92
      %s94 = sphi 0, %s92
      %s95 = sphi 0, %s94
      %s109 = sphi 0, %s95
      %s117 = sphi 0, %s119
      %s120 = sphi 0, %s117
      %s121 = sphi 0, %s120
      %s137 = sphi 0, %s121
    $region4: #{resnet_stem.1} parent=1 // loop_header_branch
      %15 = sbr.rel (%p13) target = $region8
    $region5: #{resnet_stem.1} parent=1 // loop_body
      %s17 = ssub.s32 %s12, 1
      %s18 = ssub.s32 %s12, 2
      %s25 = sadd.s32 1, %s20
      %p26 = scmp.ge.s32.totalorder %s25, 2
      %s27 = scalar_select %p26, 0, %s25
      %s28 = sadd.s32 1, %s19
      %s29 = scalar_select %p26, %s28, %s19
      %p30 = scmp.ge.s32.totalorder %s29, 2
      %s31 = scalar_select %p30, 0, %s29
      %s32 = ssub.s32 %s19, %s31
      %s33 = ssub.s32 %s20, %s27
      %s34 = sor.u32 %s32, %s33
      %p35 = scmp.eq.s32.totalorder %s34, 0
      %s37 = sadd.s32 %s36, 1
      %s38 = scalar_select %p35, %s36, %s37
      %p41 = pneg %p35
      %p42 = scmp.eq.s32.totalorder %s12, 3
      %p43 = por %p41, %p42
      %p44 = scmp.ne.s32.totalorder %s36, %s39
      %p45 = scmp.eq.s32.totalorder %s12, 0
      %p46 = por %p44, %p45
      %p47 = scmp.ne.s32.totalorder %s36, %s39
      %p48 = scmp.eq.s32.totalorder %s17, 3
      %p49 = por %p47, %p48
      %p50 = scmp.ne.s32.totalorder %s39, %s40
      %p51 = scmp.eq.s32.totalorder %s17, 0
      %p52 = por %p50, %p51
      %p53 = scmp.ne.s32.totalorder %s39, %s40
      %p54 = scmp.eq.s32.totalorder %s18, 3
      %p55 = por %p53, %p54
      %p57 = scmp.ne.s32.totalorder %s40, %s56
      %p58 = scmp.eq.s32.totalorder %s18, 0
      %p59 = por %p57, %p58
      %s60 = sadd.s32 %s20, 1
      %s61 = smul.u32 %s60, 8
      %s62 = sadd.s32 %s27, 1
      %s63 = smul.u32 %s62, 8
      %s64 = ssub.s32 %s19, %s31
      %s65 = ssub.s32 %s61, %s63
      %s66 = sor.u32 %s64, %s65
      %p67 = scmp.eq.s32.totalorder %s66, 0
      %s69 = sadd.s32 %s68, 1
      %s70 = scalar_select %p67, %s68, %s69
      %p73 = pneg %p67
      %p74 = scmp.eq.s32.totalorder %s12, 3
      %p75 = por %p73, %p74
      %p76 = scmp.ne.s32.totalorder %s68, %s71
      %p77 = scmp.eq.s32.totalorder %s12, 0
      %p78 = por %p76, %p77
      %p79 = scmp.ne.s32.totalorder %s68, %s71
      %p80 = scmp.eq.s32.totalorder %s17, 3
      %p81 = por %p79, %p80
      %p82 = scmp.ne.s32.totalorder %s71, %s72
      %p83 = scmp.eq.s32.totalorder %s17, 0
      %p84 = por %p82, %p83
      %p85 = scmp.ne.s32.totalorder %s71, %s72
      %p86 = scmp.eq.s32.totalorder %s18, 3
      %p87 = por %p85, %p86
      %p89 = scmp.ne.s32.totalorder %s72, %s88
      %p90 = scmp.eq.s32.totalorder %s18, 0
      %p91 = por %p89, %p90
      %s93 = sadd.s32 %s92, 1
      %p96 = scmp.eq.s32.totalorder %s12, 3
      %p97 = scmp.ne.s32.totalorder %s92, %s94
      %p98 = scmp.eq.s32.totalorder %s12, 0
      %p99 = por %p97, %p98
      %p100 = scmp.ne.s32.totalorder %s92, %s94
      %p101 = scmp.eq.s32.totalorder %s17, 3
      %p102 = por %p100, %p101
      %p103 = scmp.ne.s32.totalorder %s94, %s95
      %p104 = scmp.eq.s32.totalorder %s17, 0
      %p105 = por %p103, %p104
      %p106 = scmp.ne.s32.totalorder %s94, %s95
      %p107 = scmp.eq.s32.totalorder %s18, 3
      %p108 = por %p106, %p107
      %p110 = scmp.ne.s32.totalorder %s95, %s109
      %p111 = scmp.eq.s32.totalorder %s18, 0
      %p112 = por %p110, %p111
      %s113 = ssub.s32 %s19, %s31
      %s114 = ssub.s32 %s20, %s27
      %s115 = sor.u32 %s113, %s114
      %p116 = scmp.eq.s32.totalorder %s115, 0
      %s118 = sadd.s32 %s117, 1
      %s119 = scalar_select %p116, %s117, %s118
      %p122 = pneg %p116
      %p123 = scmp.eq.s32.totalorder %s12, 3
      %p124 = por %p122, %p123
      %p125 = scmp.ne.s32.totalorder %s117, %s120
      %p126 = scmp.eq.s32.totalorder %s12, 0
      %p127 = por %p125, %p126
      %p128 = scmp.ne.s32.totalorder %s117, %s120
      %p129 = scmp.eq.s32.totalorder %s17, 3
      %p130 = por %p128, %p129
      %p131 = scmp.ne.s32.totalorder %s120, %s121
      %p132 = scmp.eq.s32.totalorder %s17, 0
      %p133 = por %p131, %p132
      %p134 = scmp.ne.s32.totalorder %s120, %s121
      %p135 = scmp.eq.s32.totalorder %s18, 3
      %p136 = por %p134, %p135
      %p138 = scmp.ne.s32.totalorder %s121, %s137
      %p139 = scmp.eq.s32.totalorder %s18, 0
      %p140 = por %p138, %p139
      %p141 = scmp.le.s32.totalorder 1, %s12
      %p142 = scmp.lt.s32.totalorder %s12, 5
      %p143 = pnand %p141, %p142
      %p144 = pneg %p143
      // Predicated region
      $region9: #{resnet_stem.1} parent=5 // pred_check
        _
      $region10: #{resnet_stem.1} parent=5 // pred_check_branch
        %146 = sbr.rel (%p143) target = $region12
      $region11: #{resnet_stem.1} parent=5 // pred_region
        %s147 = ssub.s32 %s12, 1
        // Predicated region
        $region13: #{resnet_stem.1} parent=11 // pred_check
          %p148 = pneg %p105
        $region14: #{resnet_stem.1} parent=11 // pred_check_branch
          %150 = sbr.rel (%p148) target = $region16
        $region15: #{resnet_stem.1} parent=11 // pred_region
          _
        $region16: #{resnet_stem.1} parent=11 // pred_fallthru
          _
      $region12: #{resnet_stem.1} parent=5 // pred_fallthru
        _
      %p151 = scmp.lt.s32.totalorder %s12, 4
      // Predicated region
      $region17: #{resnet_stem.1} parent=5 // pred_check
        %p152 = pneg %p151
      $region18: #{resnet_stem.1} parent=5 // pred_check_branch
        %154 = sbr.rel (%p152) target = $region20
      $region19: #{resnet_stem.1} parent=5 // pred_region
        // Predicated region
        $region21: #{resnet_stem.1} parent=19 // pred_check
          %p155 = pneg %p46
        $region22: #{resnet_stem.1} parent=19 // pred_check_branch
          %157 = sbr.rel (%p155) target = $region24
        $region23: #{resnet_stem.1} parent=19 // pred_region
          %s158 = smul.u32 32, %s20
          %s159 = ssub.s32 68, %s158
          %p160 = scmp.lt.s32.totalorder %s159, 32
          %s161 = scalar_select %p160, %s159, 32
          %s162 = smul.u32 64, %s161
          %s163 = smul.u32 %s162, 2
          %p164 = scmp.lt.s32.totalorder %s19, 1
          %s165 = scalar_select %p164, %s19, 1
          %p166 = scmp.lt.s32.totalorder %s158, 67
          %s167 = scalar_select %p166, %s158, 67
          %s168 = smul.addr %s167, 2
          %s169 = smul.addr %s165, 136
          %s170 = sadd.s32 %s168, %s169
          %s171 = smul.addr %s170, 4
          %s172 = scalar_lea.vmem %s0, %s171
          %s173 = smul.u32 32, %s20
          %s174 = ssub.s32 68, %s173
          %p175 = scmp.lt.s32.totalorder %s174, 32
          %s176 = scalar_select %p175, %s174, 32
          %s177 = smul.u32 64, %s176
          %s178 = smul.u32 %s177, 2
        $region24: #{resnet_stem.1} parent=19 // pred_fallthru
          _
        // Predicated region
        $region25: #{resnet_stem.1} parent=19 // pred_check
          %p179 = pneg %p78
        $region26: #{resnet_stem.1} parent=19 // pred_check_branch
          %181 = sbr.rel (%p179) target = $region28
        $region27: #{resnet_stem.1} parent=19 // pred_region
          %s182 = sadd.s32 %s20, 1
          %s183 = smul.u32 %s182, 8
          %s184 = smul.u32 4, %s183
          %p185 = scmp.lt.s32.totalorder %s19, 1
          %s186 = scalar_select %p185, %s19, 1
          %p187 = scmp.lt.s32.totalorder %s184, 67
          %s188 = scalar_select %p187, %s184, 67
          %s189 = smul.addr %s188, 2
          %s190 = smul.addr %s186, 136
          %s191 = sadd.s32 %s189, %s190
          %s192 = smul.addr %s191, 4
          %s193 = scalar_lea.vmem %s1, %s192
          %s194 = sadd.s32 %s20, 1
          %s195 = smul.u32 %s194, 8
          %s196 = smul.u32 4, %s195
        $region28: #{resnet_stem.1} parent=19 // pred_fallthru
          _
      $region20: #{resnet_stem.1} parent=5 // pred_fallthru
        _
      %p197 = scmp.le.s32.totalorder 1, %s12
      %p198 = scmp.lt.s32.totalorder %s12, 5
      %p199 = pnand %p197, %p198
      %p200 = pneg %p199
      // Predicated region
      $region29: #{resnet_stem.1} parent=5 // pred_check
        _
      $region30: #{resnet_stem.1} parent=5 // pred_check_branch
        %202 = sbr.rel (%p199) target = $region32
      $region31: #{resnet_stem.1} parent=5 // pred_region
        %s203 = ssub.s32 %s12, 1
        %s204 = smul.u32 32, %s22
        %s205 = ssub.s32 68, %s204
        %p206 = scmp.lt.s32.totalorder %s205, 32
        %s207 = scalar_select %p206, %s205, 32
        %s208 = smul.u32 64, %s207
        %s209 = smul.u32 %s208, 2
        %p210 = scmp.lt.s32.totalorder %s21, 1
        %s211 = scalar_select %p210, %s21, 1
        %p212 = scmp.lt.s32.totalorder %s204, 67
        %s213 = scalar_select %p212, %s204, 67
        %s214 = smul.addr %s213, 2
        %s215 = smul.addr %s211, 136
        %s216 = sadd.s32 %s214, %s215
        %s217 = smul.addr %s216, 4
        %s218 = scalar_lea.vmem %s0, %s217
        %p219 = pneg %p52
        %p220 = pneg %p49
        %s221 = sadd.s32 %s22, 1
        %s222 = smul.u32 %s221, 8
        %s223 = smul.u32 4, %s222
        %p224 = scmp.lt.s32.totalorder %s21, 1
        %s225 = scalar_select %p224, %s21, 1
        %p226 = scmp.lt.s32.totalorder %s223, 67
        %s227 = scalar_select %p226, %s223, 67
        %s228 = smul.addr %s227, 2
        %s229 = smul.addr %s225, 136
        %s230 = sadd.s32 %s228, %s229
        %s231 = smul.addr %s230, 4
        %s232 = scalar_lea.vmem %s1, %s231
        %p233 = pneg %p84
        %p234 = pneg %p81
        %p235 = pneg %p105
        %p236 = pneg %p102
        %p237 = pneg %p133
        %p238 = pneg %p130
        %s239 = sand.u32 %s120, 1
        %s240 = scalar_lea.sflag [#allocation5], %s239
        %s241 = sand.u32 %s120, 1
        %s242 = smul.addr %s241, 32
        %s243 = scalar_lea.vmem [#allocation4], %s242
        %s244 = smul.u32 32, %s22
        %s245 = ssub.s32 68, %s244
        %p246 = scmp.lt.s32.totalorder %s245, 32
        %s247 = scalar_select %p246, %s245, 32
        %s248 = smul.u32 64, %s247
        %s249 = smul.u32 %s248, 2
        %p250 = scmp.lt.s32.totalorder %s21, 1
        %s251 = scalar_select %p250, %s21, 1
        %p252 = scmp.lt.s32.totalorder %s244, 67
        %s253 = scalar_select %p252, %s244, 67
        %s254 = smul.addr %s253, 2
        %s255 = smul.addr %s251, 136
        %s256 = sadd.s32 %s254, %s255
        %s257 = smul.addr %s256, 4
        %s258 = scalar_lea.vmem %s0, %s257
        %s259 = smul.u32 32, %s22
        %s260 = ssub.s32 68, %s259
        %p261 = scmp.lt.s32.totalorder %s260, 32
        %s262 = scalar_select %p261, %s260, 32
        %s263 = smul.u32 64, %s262
        %s264 = smul.u32 %s263, 2
        %s265 = sadd.s32 %s22, 1
        %s266 = smul.u32 %s265, 8
        %s267 = smul.u32 4, %s266
        %p268 = scmp.lt.s32.totalorder %s21, 1
        %s269 = scalar_select %p268, %s21, 1
        %p270 = scmp.lt.s32.totalorder %s267, 67
        %s271 = scalar_select %p270, %s267, 67
        %s272 = smul.addr %s271, 2
        %s273 = smul.addr %s269, 136
        %s274 = sadd.s32 %s272, %s273
        %s275 = smul.addr %s274, 4
        %s276 = scalar_lea.vmem %s1, %s275
        %s277 = sadd.s32 %s22, 1
        %s278 = smul.u32 %s277, 8
        %s279 = smul.u32 4, %s278
        %s280 = smul.u32 4, %s22
        %v282 = vld [vmem:[%s2] sm:$0xf]
        %v283 = vld [vmem:[%s2 + $0x4] sm:$0xf]
        %v284 = vld [vmem:[%s2 + $0x8] sm:$0xf]
        %v285 = vld [vmem:[%s2 + $0xc] sm:$0xf]
        %v286 = vld [vmem:[%s2 + $0x10] sm:$0xf]
        %v287 = vld [vmem:[%s2 + $0x14] sm:$0xf]
        %v288 = vld [vmem:[%s2 + $0x18] sm:$0xf]
        %v289 = vld [vmem:[%s2 + $0x1c] sm:$0xf]
        %v290 = vld [vmem:[%s2 + $0x20] sm:$0xf]
        %v291 = vld [vmem:[%s2 + $0x24] sm:$0xf]
        %v292 = vld [vmem:[%s2 + $0x28] sm:$0xf]
        %v293 = vld [vmem:[%s2 + $0x2c] sm:$0xf]
        %v294 = vld [vmem:[%s2 + $0x30] sm:$0xf]
        %v295 = vld [vmem:[%s2 + $0x34] sm:$0xf]
        %v296 = vld [vmem:[%s2 + $0x38] sm:$0xf]
        %v297 = vld [vmem:[%s2 + $0x3c] sm:$0xf]
        %v298 = vld [vmem:[%s2 + $0x40] sm:$0xf]
        %v299 = vld [vmem:[%s2 + $0x44] sm:$0xf]
        %v300 = vld [vmem:[%s2 + $0x48] sm:$0x3]
        %v301 = vld [vmem:[%s258] sm:$0xff]
        %v302 = vld [vmem:[%s258 + $0x8] sm:$0xff]
        %v303 = vld [vmem:[%s258 + $0x10] sm:$0xff]
        %v304 = vld [vmem:[%s258 + $0x18] sm:$0xff]
        %v305 = vld [vmem:[%s258 + $0x20] sm:$0xff]
        %v306 = vld [vmem:[%s258 + $0x28] sm:$0xff]
        %v307 = vld [vmem:[%s258 + $0x30] sm:$0xff]
        %v308 = vld [vmem:[%s258 + $0x38] sm:$0xff]
        %v309 = vld [vmem:[%s258 + $0x40] sm:$0xff]
        %v310 = vld [vmem:[%s258 + $0x48] sm:$0xff]
        %v311 = vld [vmem:[%s258 + $0x50] sm:$0xff]
        %v312 = vld [vmem:[%s258 + $0x58] sm:$0xff]
        %v313 = vld [vmem:[%s258 + $0x60] sm:$0xff]
        %v314 = vld [vmem:[%s258 + $0x68] sm:$0xff]
        %v315 = vld [vmem:[%s258 + $0x70] sm:$0xff]
        %v316 = vld [vmem:[%s258 + $0x78] sm:$0xff]
        %v317 = vld [vmem:[%s258 + $0x80] sm:$0xff]
        %v318 = vld [vmem:[%s258 + $0x88] sm:$0xff]
        %v319 = vld [vmem:[%s258 + $0x90] sm:$0xff]
        %v320 = vld [vmem:[%s258 + $0x98] sm:$0xff]
        %v321 = vld [vmem:[%s258 + $0xa0] sm:$0xff]
        %v322 = vld [vmem:[%s258 + $0xa8] sm:$0xff]
        %v323 = vld [vmem:[%s258 + $0xb0] sm:$0xff]
        %v324 = vld [vmem:[%s258 + $0xb8] sm:$0xff]
        %v325 = vld [vmem:[%s258 + $0xc0] sm:$0xff]
        %v326 = vld [vmem:[%s258 + $0xc8] sm:$0xff]
        %v327 = vld [vmem:[%s258 + $0xd0] sm:$0xff]
        %v328 = vld [vmem:[%s258 + $0xd8] sm:$0xff]
        %v329 = vld [vmem:[%s258 + $0xe0] sm:$0xff]
        %v330 = vld [vmem:[%s258 + $0xe8] sm:$0xff]
        %v331 = vld [vmem:[%s258 + $0xf0] sm:$0xff]
        %v332 = vld [vmem:[%s258 + $0xf8] sm:$0xff]
        %v365 = vunpack.c.l.b16 %v301
        %v366 = vunpack.c.h.b16 %v301
        %v367 = vunpack.c.l.b16 %v302
        %v368 = vunpack.c.h.b16 %v302
        %v369 = vunpack.c.l.b16 %v303
        %v370 = vunpack.c.h.b16 %v303
        %v371 = vunpack.c.l.b16 %v304
        %v372 = vunpack.c.h.b16 %v304
        %v373 = vunpack.c.l.b16 %v305
        %v374 = vunpack.c.h.b16 %v305
        %v375 = vunpack.c.l.b16 %v306
        %v376 = vunpack.c.h.b16 %v306
        %v377 = vunpack.c.l.b16 %v307
        %v378 = vunpack.c.h.b16 %v307
        %v379 = vunpack.c.l.b16 %v308
        %v380 = vunpack.c.h.b16 %v308
        %v381 = vunpack.c.l.b16 %v309
        %v382 = vunpack.c.h.b16 %v309
        %v383 = vunpack.c.l.b16 %v310
        %v384 = vunpack.c.h.b16 %v310
        %v385 = vunpack.c.l.b16 %v311
        %v386 = vunpack.c.h.b16 %v311
        %v387 = vunpack.c.l.b16 %v312
        %v388 = vunpack.c.h.b16 %v312
        %v389 = vunpack.c.l.b16 %v313
        %v390 = vunpack.c.h.b16 %v313
        %v391 = vunpack.c.l.b16 %v314
        %v392 = vunpack.c.h.b16 %v314
        %v393 = vunpack.c.l.b16 %v315
        %v394 = vunpack.c.h.b16 %v315
        %v395 = vunpack.c.l.b16 %v316
        %v396 = vunpack.c.h.b16 %v316
        %v397 = vunpack.c.l.b16 %v317
        %v398 = vunpack.c.h.b16 %v317
        %v399 = vunpack.c.l.b16 %v318
        %v400 = vunpack.c.h.b16 %v318
        %v401 = vunpack.c.l.b16 %v319
        %v402 = vunpack.c.h.b16 %v319
        %v403 = vunpack.c.l.b16 %v320
        %v404 = vunpack.c.h.b16 %v320
        %v405 = vunpack.c.l.b16 %v321
        %v406 = vunpack.c.h.b16 %v321
        %v407 = vunpack.c.l.b16 %v322
        %v408 = vunpack.c.h.b16 %v322
        %v409 = vunpack.c.l.b16 %v323
        %v410 = vunpack.c.h.b16 %v323
        %v411 = vunpack.c.l.b16 %v324
        %v412 = vunpack.c.h.b16 %v324
        %v413 = vunpack.c.l.b16 %v325
        %v414 = vunpack.c.h.b16 %v325
        %v415 = vunpack.c.l.b16 %v326
        %v416 = vunpack.c.h.b16 %v326
        %v417 = vunpack.c.l.b16 %v327
        %v418 = vunpack.c.h.b16 %v327
        %v419 = vunpack.c.l.b16 %v328
        %v420 = vunpack.c.h.b16 %v328
        %v421 = vunpack.c.l.b16 %v329
        %v422 = vunpack.c.h.b16 %v329
        %v423 = vunpack.c.l.b16 %v330
        %v424 = vunpack.c.h.b16 %v330
        %v425 = vunpack.c.l.b16 %v331
        %v426 = vunpack.c.h.b16 %v331
        %v427 = vunpack.c.l.b16 %v332
        %v428 = vunpack.c.h.b16 %v332
        %v429 = vpack.c.b16 %v367, %v365
        %v430 = vpack.c.b16 %v368, %v366
        %v431 = vpack.c.b16 %v371, %v369
        %v432 = vpack.c.b16 %v372, %v370
        %v433 = vpack.c.b16 %v375, %v373
        %v434 = vpack.c.b16 %v376, %v374
        %v435 = vpack.c.b16 %v379, %v377
        %v436 = vpack.c.b16 %v380, %v378
        %v437 = vpack.c.b16 %v383, %v381
        %v438 = vpack.c.b16 %v384, %v382
        %v439 = vpack.c.b16 %v387, %v385
        %v440 = vpack.c.b16 %v388, %v386
        %v441 = vpack.c.b16 %v391, %v389
        %v442 = vpack.c.b16 %v392, %v390
        %v443 = vpack.c.b16 %v395, %v393
        %v444 = vpack.c.b16 %v396, %v394
        %v445 = vpack.c.b16 %v399, %v397
        %v446 = vpack.c.b16 %v400, %v398
        %v447 = vpack.c.b16 %v403, %v401
        %v448 = vpack.c.b16 %v404, %v402
        %v449 = vpack.c.b16 %v407, %v405
        %v450 = vpack.c.b16 %v408, %v406
        %v451 = vpack.c.b16 %v411, %v409
        %v452 = vpack.c.b16 %v412, %v410
        %v453 = vpack.c.b16 %v415, %v413
        %v454 = vpack.c.b16 %v416, %v414
        %v455 = vpack.c.b16 %v419, %v417
        %v456 = vpack.c.b16 %v420, %v418
        %v457 = vpack.c.b16 %v423, %v421
        %v458 = vpack.c.b16 %v424, %v422
        %v459 = vpack.c.b16 %v427, %v425
        %v460 = vpack.c.b16 %v428, %v426
        %v496 = vunpack.c.l.b16 %v282
        %v497 = vunpack.c.l.b16 %v283
        %v498 = vunpack.c.l.b16 %v284
        %v499 = vunpack.c.l.b16 %v285
        %v500 = vunpack.c.l.b16 %v286
        %v501 = vunpack.c.l.b16 %v287
        %v502 = vunpack.c.l.b16 %v288
        %v503 = vunpack.c.l.b16 %v289
        %v504 = vunpack.c.l.b16 %v290
        %v505 = vunpack.c.l.b16 %v291
        %v506 = vunpack.c.l.b16 %v292
        %v507 = vunpack.c.l.b16 %v293
        %v508 = vunpack.c.l.b16 %v294
        %v509 = vunpack.c.l.b16 %v295
        %v510 = vunpack.c.l.b16 %v296
        %v511 = vunpack.c.l.b16 %v297
        %v512 = vunpack.c.l.b16 %v298
        %v513 = vunpack.c.l.b16 %v299
        %v514 = vunpack.c.l.b16 %v300
        %v515 = vpack.c.b16 %v497, %v496
        %v516 = vpack.c.b16 %v499, %v498
        %v517 = vpack.c.b16 %v501, %v500
        %v518 = vpack.c.b16 %v503, %v502
        %v519 = vpack.c.b16 %v505, %v504
        %v520 = vpack.c.b16 %v507, %v506
        %v521 = vpack.c.b16 %v509, %v508
        %v522 = vpack.c.b16 %v511, %v510
        %v523 = vpack.c.b16 %v513, %v512
        %v524 = vpack.c.b16 %v514, %v514
        %vm534 = vcmask 162816
        %v536 = vsel %vm534, %v430, 0
        %v539 = vsel %vm534, %v432, 0
        %v542 = vsel %vm534, %v434, 0
        %v545 = vsel %vm534, %v436, 0
        %v548 = vsel %vm534, %v438, 0
        %v551 = vsel %vm534, %v440, 0
        %v554 = vsel %vm534, %v442, 0
        %v557 = vsel %vm534, %v444, 0
        %v560 = vsel %vm534, %v446, 0
        %v563 = vsel %vm534, %v448, 0
        %v566 = vsel %vm534, %v450, 0
        %v569 = vsel %vm534, %v452, 0
        %v572 = vsel %vm534, %v454, 0
        %v575 = vsel %vm534, %v456, 0
        %v578 = vsel %vm534, %v458, 0
        %v581 = vsel %vm534, %v460, 0
        %vm583 = vcmask 1041408
        %v585 = vsel %vm583, %v524, 0
        %587 = vmatprep.subr.bf16.mxu0 0
        %588 = vmatpush1.bf16.msra.mxu0 %v515
        %589 = vmatprep.subr.bf16.mxu0 0
        %590 = vmatpush1.bf16.msra.mxu0 %v516
        %591 = vmatprep.subr.bf16.mxu0 0
        %592 = vmatpush1.bf16.msra.mxu0 %v517
        %593 = vmatprep.subr.bf16.mxu0 0
        %594 = vmatpush1.bf16.msra.mxu0 %v518
        %595 = vmatprep.subr.bf16.mxu0 0
        %596 = vmatpush1.bf16.msra.mxu0 %v519
        %597 = vmatprep.subr.bf16.mxu0 0
        %598 = vmatpush1.bf16.msra.mxu0 %v520
        %599 = vmatprep.subr.bf16.mxu0 0
        %600 = vmatpush1.bf16.msra.mxu0 %v521
        %601 = vmatprep.subr.bf16.mxu0 0
        %602 = vmatpush1.bf16.msra.mxu0 %v522
        %603 = vmatprep.subr.bf16.mxu0 0
        %604 = vmatpush1.bf16.msra.mxu0 %v523
        %605 = vmatprep.subr.bf16.mxu0 0
        %606 = vmatpush1.bf16.msra.mxu0 %v585
        %607 = vmatprep.subr.bf16.mxu0 0
        %608 = vmatpush1.bf16.msra.mxu0 0
        %609 = vmatprep.subr.bf16.mxu0 0
        %610 = vmatpush1.bf16.msra.mxu0 0
        %611 = vmatprep.subr.bf16.mxu0 0
        %612 = vmatpush1.bf16.msra.mxu0 0
        %613 = vmatprep.subr.bf16.mxu0 0
        %614 = vmatpush1.bf16.msra.mxu0 0
        %615 = vmatprep.subr.bf16.mxu0 0
        %616 = vmatpush1.bf16.msra.mxu0 0
        %617 = vmatprep.subr.bf16.mxu0 0
        %618 = vmatpush1.bf16.msra.mxu0 0
        %619 = vmatprep.mubr.bf16.mxu0 %v536
        %620 = vmatmul.mubr.bf16.gmra.mrb[0].mxu0 %v429
        %v621 = vpop.f32.mrb[0].mxu0
        %v622 = vadd.f32 0.0, %v621
        %v623 = vpop.f32.mrb[0].mxu0
        %v624 = vpop.f32.mrb[0].mxu0
        %v625 = vadd.f32 0.0, %v624
        %v626 = vpop.f32.mrb[0].mxu0
        %627 = vmatprep.mubr.bf16.mxu0 %v539
        %628 = vmatmul.mubr.bf16.gmra.mrb[0].mxu0 %v431
        %v629 = vpop.f32.mrb[0].mxu0
        %v630 = vadd.f32 0.0, %v629
        %v631 = vpop.f32.mrb[0].mxu0
        %v632 = vpop.f32.mrb[0].mxu0
        %v633 = vadd.f32 0.0, %v632
        %v634 = vpop.f32.mrb[0].mxu0
        %635 = vmatprep.mubr.bf16.mxu0 %v542
        %636 = vmatmul.mubr.bf16.gmra.mrb[0].mxu0 %v433
        %v637 = vpop.f32.mrb[0].mxu0
        %v638 = vadd.f32 0.0, %v637
        %v639 = vpop.f32.mrb[0].mxu0
        %v640 = vpop.f32.mrb[0].mxu0
        %v641 = vadd.f32 0.0, %v640
        %v642 = vpop.f32.mrb[0].mxu0
        %643 = vmatprep.mubr.bf16.mxu0 %v545
        %644 = vmatmul.mubr.bf16.gmra.mrb[0].mxu0 %v435
        %v645 = vpop.f32.mrb[0].mxu0
        %v646 = vadd.f32 0.0, %v645
        %v647 = vpop.f32.mrb[0].mxu0
        %v648 = vpop.f32.mrb[0].mxu0
        %v649 = vadd.f32 0.0, %v648
        %v650 = vpop.f32.mrb[0].mxu0
        %651 = vmatprep.mubr.bf16.mxu0 %v548
        %652 = vmatmul.mubr.bf16.gmra.mrb[0].mxu0 %v437
        %v653 = vpop.f32.mrb[0].mxu0
        %v654 = vadd.f32 0.0, %v653
        %v655 = vpop.f32.mrb[0].mxu0
        %v656 = vpop.f32.mrb[0].mxu0
        %v657 = vadd.f32 0.0, %v656
        %v658 = vpop.f32.mrb[0].mxu0
        %659 = vmatprep.mubr.bf16.mxu0 %v551
        %660 = vmatmul.mubr.bf16.gmra.mrb[0].mxu0 %v439
        %v661 = vpop.f32.mrb[0].mxu0
        %v662 = vadd.f32 0.0, %v661
        %v663 = vpop.f32.mrb[0].mxu0
        %v664 = vpop.f32.mrb[0].mxu0
        %v665 = vadd.f32 0.0, %v664
        %v666 = vpop.f32.mrb[0].mxu0
        %667 = vmatprep.mubr.bf16.mxu0 %v554
        %668 = vmatmul.mubr.bf16.gmra.mrb[0].mxu0 %v441
        %v669 = vpop.f32.mrb[0].mxu0
        %v670 = vadd.f32 0.0, %v669
        %v671 = vpop.f32.mrb[0].mxu0
        %v672 = vpop.f32.mrb[0].mxu0
        %v673 = vadd.f32 0.0, %v672
        %v674 = vpop.f32.mrb[0].mxu0
        %675 = vmatprep.mubr.bf16.mxu0 %v557
        %676 = vmatmul.mubr.bf16.gmra.mrb[0].mxu0 %v443
        %v677 = vpop.f32.mrb[0].mxu0
        %v678 = vadd.f32 0.0, %v677
        %v679 = vpop.f32.mrb[0].mxu0
        %v680 = vpop.f32.mrb[0].mxu0
        %v681 = vadd.f32 0.0, %v680
        %v682 = vpop.f32.mrb[0].mxu0
        %683 = vmatprep.mubr.bf16.mxu0 %v560
        %684 = vmatmul.mubr.bf16.gmra.mrb[0].mxu0 %v445
        %v685 = vpop.f32.mrb[0].mxu0
        %v686 = vadd.f32 0.0, %v685
        %v687 = vpop.f32.mrb[0].mxu0
        %v688 = vpop.f32.mrb[0].mxu0
        %v689 = vadd.f32 0.0, %v688
        %v690 = vpop.f32.mrb[0].mxu0
        %691 = vmatprep.mubr.bf16.mxu0 %v563
        %692 = vmatmul.mubr.bf16.gmra.mrb[0].mxu0 %v447
        %v693 = vpop.f32.mrb[0].mxu0
        %v694 = vadd.f32 0.0, %v693
        %v695 = vpop.f32.mrb[0].mxu0
        %v696 = vpop.f32.mrb[0].mxu0
        %v697 = vadd.f32 0.0, %v696
        %v698 = vpop.f32.mrb[0].mxu0
        %699 = vmatprep.mubr.bf16.mxu0 %v566
        %700 = vmatmul.mubr.bf16.gmra.mrb[0].mxu0 %v449
        %v701 = vpop.f32.mrb[0].mxu0
        %v702 = vadd.f32 0.0, %v701
        %v703 = vpop.f32.mrb[0].mxu0
        %v704 = vpop.f32.mrb[0].mxu0
        %v705 = vadd.f32 0.0, %v704
        %v706 = vpop.f32.mrb[0].mxu0
        %707 = vmatprep.mubr.bf16.mxu0 %v569
        %708 = vmatmul.mubr.bf16.gmra.mrb[0].mxu0 %v451
        %v709 = vpop.f32.mrb[0].mxu0
        %v710 = vadd.f32 0.0, %v709
        %v711 = vpop.f32.mrb[0].mxu0
        %v712 = vpop.f32.mrb[0].mxu0
        %v713 = vadd.f32 0.0, %v712
        %v714 = vpop.f32.mrb[0].mxu0
        %715 = vmatprep.mubr.bf16.mxu0 %v572
        %716 = vmatmul.mubr.bf16.gmra.mrb[0].mxu0 %v453
        %v717 = vpop.f32.mrb[0].mxu0
        %v718 = vadd.f32 0.0, %v717
        %v719 = vpop.f32.mrb[0].mxu0
        %v720 = vpop.f32.mrb[0].mxu0
        %v721 = vadd.f32 0.0, %v720
        %v722 = vpop.f32.mrb[0].mxu0
        %723 = vmatprep.mubr.bf16.mxu0 %v575
        %724 = vmatmul.mubr.bf16.gmra.mrb[0].mxu0 %v455
        %v725 = vpop.f32.mrb[0].mxu0
        %v726 = vadd.f32 0.0, %v725
        %v727 = vpop.f32.mrb[0].mxu0
        %v728 = vpop.f32.mrb[0].mxu0
        %v729 = vadd.f32 0.0, %v728
        %v730 = vpop.f32.mrb[0].mxu0
        %731 = vmatprep.mubr.bf16.mxu0 %v578
        %732 = vmatmul.mubr.bf16.gmra.mrb[0].mxu0 %v457
        %v733 = vpop.f32.mrb[0].mxu0
        %v734 = vadd.f32 0.0, %v733
        %v735 = vpop.f32.mrb[0].mxu0
        %v736 = vpop.f32.mrb[0].mxu0
        %v737 = vadd.f32 0.0, %v736
        %v738 = vpop.f32.mrb[0].mxu0
        %739 = vmatprep.mubr.bf16.mxu0 %v581
        %740 = vmatmul.mubr.bf16.gmra.mrb[0].mxu0 %v459
        %v741 = vpop.f32.mrb[0].mxu0
        %v742 = vadd.f32 0.0, %v741
        %v743 = vpop.f32.mrb[0].mxu0
        %v744 = vpop.f32.mrb[0].mxu0
        %v745 = vadd.f32 0.0, %v744
        %v746 = vpop.f32.mrb[0].mxu0
        %747 = vdwg.mxu0
        %v748 = vmax.f32 %v622, 0.0
        %v749 = vmax.f32 %v625, 0.0
        %v750 = vmax.f32 %v630, 0.0
        %v751 = vmax.f32 %v633, 0.0
        %v752 = vmax.f32 %v638, 0.0
        %v753 = vmax.f32 %v641, 0.0
        %v754 = vmax.f32 %v646, 0.0
        %v755 = vmax.f32 %v649, 0.0
        %v756 = vmax.f32 %v654, 0.0
        %v757 = vmax.f32 %v657, 0.0
        %v758 = vmax.f32 %v662, 0.0
        %v759 = vmax.f32 %v665, 0.0
        %v760 = vmax.f32 %v670, 0.0
        %v761 = vmax.f32 %v673, 0.0
        %v762 = vmax.f32 %v678, 0.0
        %v763 = vmax.f32 %v681, 0.0
        %v764 = vmax.f32 %v686, 0.0
        %v765 = vmax.f32 %v689, 0.0
        %v766 = vmax.f32 %v694, 0.0
        %v767 = vmax.f32 %v697, 0.0
        %v768 = vmax.f32 %v702, 0.0
        %v769 = vmax.f32 %v705, 0.0
        %v770 = vmax.f32 %v710, 0.0
        %v771 = vmax.f32 %v713, 0.0
        %v772 = vmax.f32 %v718, 0.0
        %v773 = vmax.f32 %v721, 0.0
        %v774 = vmax.f32 %v726, 0.0
        %v775 = vmax.f32 %v729, 0.0
        %v776 = vmax.f32 %v734, 0.0
        %v777 = vmax.f32 %v737, 0.0
        %v778 = vmax.f32 %v742, 0.0
        %v779 = vmax.f32 %v745, 0.0
        %vm780 = vcmask 523264
        %781 = vst.msk [vmem:[#allocation2] sm:$0xff] %vm780, %v748
        %782 = vst.msk [vmem:[#allocation2 + $0x8] sm:$0xff] %vm780, %v749
        %783 = vst.msk [vmem:[#allocation2 + $0x10] sm:$0xff] %vm780, %v750
        %784 = vst.msk [vmem:[#allocation2 + $0x18] sm:$0xff] %vm780, %v751
        %785 = vst.msk [vmem:[#allocation2 + $0x20] sm:$0xff] %vm780, %v752
        %786 = vst.msk [vmem:[#allocation2 + $0x28] sm:$0xff] %vm780, %v753
        %787 = vst.msk [vmem:[#allocation2 + $0x30] sm:$0xff] %vm780, %v754
        %788 = vst.msk [vmem:[#allocation2 + $0x38] sm:$0xff] %vm780, %v755
        %789 = vst.msk [vmem:[#allocation2 + $0x40] sm:$0xff] %vm780, %v756
        %790 = vst.msk [vmem:[#allocation2 + $0x48] sm:$0xff] %vm780, %v757
        %791 = vst.msk [vmem:[#allocation2 + $0x50] sm:$0xff] %vm780, %v758
        %792 = vst.msk [vmem:[#allocation2 + $0x58] sm:$0xff] %vm780, %v759
        %793 = vst.msk [vmem:[#allocation2 + $0x60] sm:$0xff] %vm780, %v760
        %794 = vst.msk [vmem:[#allocation2 + $0x68] sm:$0xff] %vm780, %v761
        %795 = vst.msk [vmem:[#allocation2 + $0x70] sm:$0xff] %vm780, %v762
        %796 = vst.msk [vmem:[#allocation2 + $0x78] sm:$0xff] %vm780, %v763
        %797 = vst.msk [vmem:[#allocation2 + $0x80] sm:$0xff] %vm780, %v764
        %798 = vst.msk [vmem:[#allocation2 + $0x88] sm:$0xff] %vm780, %v765
        %799 = vst.msk [vmem:[#allocation2 + $0x90] sm:$0xff] %vm780, %v766
        %800 = vst.msk [vmem:[#allocation2 + $0x98] sm:$0xff] %vm780, %v767
        %801 = vst.msk [vmem:[#allocation2 + $0xa0] sm:$0xff] %vm780, %v768
        %802 = vst.msk [vmem:[#allocation2 + $0xa8] sm:$0xff] %vm780, %v769
        %803 = vst.msk [vmem:[#allocation2 + $0xb0] sm:$0xff] %vm780, %v770
        %804 = vst.msk [vmem:[#allocation2 + $0xb8] sm:$0xff] %vm780, %v771
        %805 = vst.msk [vmem:[#allocation2 + $0xc0] sm:$0xff] %vm780, %v772
        %806 = vst.msk [vmem:[#allocation2 + $0xc8] sm:$0xff] %vm780, %v773
        %807 = vst.msk [vmem:[#allocation2 + $0xd0] sm:$0xff] %vm780, %v774
        %808 = vst.msk [vmem:[#allocation2 + $0xd8] sm:$0xff] %vm780, %v775
        %809 = vst.msk [vmem:[#allocation2 + $0xe0] sm:$0xff] %vm780, %v776
        %810 = vst.msk [vmem:[#allocation2 + $0xe8] sm:$0xff] %vm780, %v777
        %811 = vst.msk [vmem:[#allocation2 + $0xf0] sm:$0xff] %vm780, %v778
        %812 = vst.msk [vmem:[#allocation2 + $0xf8] sm:$0xff] %vm780, %v779
        %v813 = vld [vmem:[%s276] sm:$0xff]
        %v814 = vld [vmem:[%s276 + $0x8] sm:$0xff]
        %v815 = vld [vmem:[%s276 + $0x10] sm:$0xff]
        %v816 = vld [vmem:[%s276 + $0x18] sm:$0xff]
        %v821 = vunpack.c.l.b16 %v813
        %v822 = vunpack.c.h.b16 %v813
        %v823 = vunpack.c.l.b16 %v814
        %v824 = vunpack.c.h.b16 %v814
        %v825 = vunpack.c.l.b16 %v815
        %v826 = vunpack.c.h.b16 %v815
        %v827 = vunpack.c.l.b16 %v816
        %v828 = vunpack.c.h.b16 %v816
        %v829 = vpack.c.b16 %v823, %v821
        %v830 = vpack.c.b16 %v824, %v822
        %v831 = vpack.c.b16 %v827, %v825
        %v832 = vpack.c.b16 %v828, %v826
        %v836 = vsel %vm534, %v830, 0
        %v839 = vsel %vm534, %v832, 0
        %841 = vmatprep.subr.bf16.mxu0 0
        %842 = vmatpush1.bf16.msra.mxu0 %v515
        %843 = vmatprep.subr.bf16.mxu0 0
        %844 = vmatpush1.bf16.msra.mxu0 %v516
        %845 = vmatprep.subr.bf16.mxu0 0
        %846 = vmatpush1.bf16.msra.mxu0 %v517
        %847 = vmatprep.subr.bf16.mxu0 0
        %848 = vmatpush1.bf16.msra.mxu0 %v518
        %849 = vmatprep.subr.bf16.mxu0 0
        %850 = vmatpush1.bf16.msra.mxu0 %v519
        %851 = vmatprep.subr.bf16.mxu0 0
        %852 = vmatpush1.bf16.msra.mxu0 %v520
        %853 = vmatprep.subr.bf16.mxu0 0
        %854 = vmatpush1.bf16.msra.mxu0 %v521
        %855 = vmatprep.subr.bf16.mxu0 0
        %856 = vmatpush1.bf16.msra.mxu0 %v522
        %857 = vmatprep.subr.bf16.mxu0 0
        %858 = vmatpush1.bf16.msra.mxu0 %v523
        %859 = vmatprep.subr.bf16.mxu0 0
        %860 = vmatpush1.bf16.msra.mxu0 %v585
        %861 = vmatprep.subr.bf16.mxu0 0
        %862 = vmatpush1.bf16.msra.mxu0 0
        %863 = vmatprep.subr.bf16.mxu0 0
        %864 = vmatpush1.bf16.msra.mxu0 0
        %865 = vmatprep.subr.bf16.mxu0 0
        %866 = vmatpush1.bf16.msra.mxu0 0
        %867 = vmatprep.subr.bf16.mxu0 0
        %868 = vmatpush1.bf16.msra.mxu0 0
        %869 = vmatprep.subr.bf16.mxu0 0
        %870 = vmatpush1.bf16.msra.mxu0 0
        %871 = vmatprep.subr.bf16.mxu0 0
        %872 = vmatpush1.bf16.msra.mxu0 0
        %873 = vmatprep.mubr.bf16.mxu0 %v836
        %874 = vmatmul.mubr.bf16.gmra.mrb[0].mxu0 %v829
        %v875 = vpop.f32.mrb[0].mxu0
        %v876 = vadd.f32 0.0, %v875
        %v877 = vpop.f32.mrb[0].mxu0
        %v878 = vpop.f32.mrb[0].mxu0
        %v879 = vadd.f32 0.0, %v878
        %v880 = vpop.f32.mrb[0].mxu0
        %881 = vmatprep.mubr.bf16.mxu0 %v839
        %882 = vmatmul.mubr.bf16.gmra.mrb[0].mxu0 %v831
        %v883 = vpop.f32.mrb[0].mxu0
        %v884 = vadd.f32 0.0, %v883
        %v885 = vpop.f32.mrb[0].mxu0
        %v886 = vpop.f32.mrb[0].mxu0
        %v887 = vadd.f32 0.0, %v886
        %v888 = vpop.f32.mrb[0].mxu0
        %889 = vdwg.mxu0
        %v890 = vmax.f32 %v876, 0.0
        %v891 = vmax.f32 %v879, 0.0
        %v892 = vmax.f32 %v884, 0.0
        %v893 = vmax.f32 %v887, 0.0
        %894 = vst.msk [vmem:[#allocation3] sm:$0xff] %vm780, %v890
        %895 = vst.msk [vmem:[#allocation3 + $0x8] sm:$0xff] %vm780, %v891
        %896 = vst.msk [vmem:[#allocation3 + $0x10] sm:$0xff] %vm780, %v892
        %897 = vst.msk [vmem:[#allocation3 + $0x18] sm:$0xff] %vm780, %v893
        %v898 = vld [vmem:[#allocation2] sm:$0xff]
        %v899 = vld [vmem:[#allocation2 + $0x8] sm:$0xff]
        %v900 = vld [vmem:[#allocation2 + $0x10] sm:$0xff]
        %v901 = vld [vmem:[#allocation2 + $0x20] sm:$0xff]
        %v902 = vld [vmem:[#allocation2 + $0x28] sm:$0xff]
        %v903 = vld [vmem:[#allocation2 + $0x30] sm:$0xff]
        %v904 = vld [vmem:[#allocation2 + $0x40] sm:$0xff]
        %v905 = vld [vmem:[#allocation2 + $0x48] sm:$0xff]
        %v906 = vld [vmem:[#allocation2 + $0x50] sm:$0xff]
        %v907 = vmax.f32 %v898, %v901
        %v908 = vmax.f32 %v899, %v902
        %v909 = vmax.f32 %v900, %v903
        %v910 = vmax.f32 %v907, %v904
        %v911 = vmax.f32 %v908, %v905
        %v912 = vmax.f32 %v909, %v906
        %v913 = vmax.f32 %v910, %v912
        %vm916 = vcmask 1046528
        %v917 = vrot.slane %v910, 1
        %v918 = vrot.slane %v911, 1
        %v919 = vsel %vm916, %v917, %v918
        %v921 = vmax.f32 %v913, %v919
        %922 = vst.msk [vmem:[%s243] sm:$0xff] %vm780, %v921
        %v923 = vld [vmem:[#allocation2 + $0x40] sm:$0xff]
        %v924 = vld [vmem:[#allocation2 + $0x48] sm:$0xff]
        %v925 = vld [vmem:[#allocation2 + $0x50] sm:$0xff]
        %v926 = vld [vmem:[#allocation2 + $0x60] sm:$0xff]
        %v927 = vld [vmem:[#allocation2 + $0x68] sm:$0xff]
        %v928 = vld [vmem:[#allocation2 + $0x70] sm:$0xff]
        %v929 = vld [vmem:[#allocation2 + $0x80] sm:$0xff]
        %v930 = vld [vmem:[#allocation2 + $0x88] sm:$0xff]
        %v931 = vld [vmem:[#allocation2 + $0x90] sm:$0xff]
        %v932 = vmax.f32 %v923, %v926
        %v933 = vmax.f32 %v924, %v927
        %v934 = vmax.f32 %v925, %v928
        %v935 = vmax.f32 %v932, %v929
        %v936 = vmax.f32 %v933, %v930
        %v937 = vmax.f32 %v934, %v931
        %v938 = vmax.f32 %v935, %v937
        %v941 = vrot.slane %v935, 1
        %v942 = vrot.slane %v936, 1
        %v943 = vsel %vm916, %v941, %v942
        %v945 = vmax.f32 %v938, %v943
        %s946 = scalar_lea.vmem %s243, 8 [#allocation4]
        %947 = vst.msk [vmem:[%s946] sm:$0xff] %vm780, %v945
        %v948 = vld [vmem:[#allocation2 + $0x80] sm:$0xff]
        %v949 = vld [vmem:[#allocation2 + $0x88] sm:$0xff]
        %v950 = vld [vmem:[#allocation2 + $0x90] sm:$0xff]
        %v951 = vld [vmem:[#allocation2 + $0xa0] sm:$0xff]
        %v952 = vld [vmem:[#allocation2 + $0xa8] sm:$0xff]
        %v953 = vld [vmem:[#allocation2 + $0xb0] sm:$0xff]
        %v954 = vld [vmem:[#allocation2 + $0xc0] sm:$0xff]
        %v955 = vld [vmem:[#allocation2 + $0xc8] sm:$0xff]
        %v956 = vld [vmem:[#allocation2 + $0xd0] sm:$0xff]
        %v957 = vmax.f32 %v948, %v951
        %v958 = vmax.f32 %v949, %v952
        %v959 = vmax.f32 %v950, %v953
        %v960 = vmax.f32 %v957, %v954
        %v961 = vmax.f32 %v958, %v955
        %v962 = vmax.f32 %v959, %v956
        %v963 = vmax.f32 %v960, %v962
        %v966 = vrot.slane %v960, 1
        %v967 = vrot.slane %v961, 1
        %v968 = vsel %vm916, %v966, %v967
        %v970 = vmax.f32 %v963, %v968
        %s971 = scalar_lea.vmem %s243, 16 [#allocation4]
        %972 = vst.msk [vmem:[%s971] sm:$0xff] %vm780, %v970
        %v973 = vld [vmem:[#allocation2 + $0xc0] sm:$0xff]
        %v974 = vld [vmem:[#allocation2 + $0xc8] sm:$0xff]
        %v975 = vld [vmem:[#allocation2 + $0xd0] sm:$0xff]
        %v976 = vld [vmem:[#allocation2 + $0xe0] sm:$0xff]
        %v977 = vld [vmem:[#allocation2 + $0xe8] sm:$0xff]
        %v978 = vld [vmem:[#allocation2 + $0xf0] sm:$0xff]
        %v979 = vld [vmem:[#allocation3] sm:$0xff]
        %v980 = vld [vmem:[#allocation3 + $0x8] sm:$0xff]
        %v981 = vld [vmem:[#allocation3 + $0x10] sm:$0xff]
        %v982 = vmax.f32 %v973, %v976
        %v983 = vmax.f32 %v974, %v977
        %v984 = vmax.f32 %v975, %v978
        %v985 = vmax.f32 %v982, %v979
        %v986 = vmax.f32 %v983, %v980
        %v987 = vmax.f32 %v984, %v981
        %v988 = vmax.f32 %v985, %v987
        %v991 = vrot.slane %v985, 1
        %v992 = vrot.slane %v986, 1
        %v993 = vsel %vm916, %v991, %v992
        %v995 = vmax.f32 %v988, %v993
        %s996 = scalar_lea.vmem %s243, 24 [#allocation4]
        %997 = vst.msk [vmem:[%s996] sm:$0xff] %vm780, %v995
        %s998 = sand.u32 %s120, 1
        %s999 = scalar_lea.sflag [#allocation5], %s998
        %s1000 = sand.u32 %s120, 1
        %s1001 = smul.addr %s1000, 32
        %s1002 = scalar_lea.vmem [#allocation4], %s1001
        // Predicated region
        $region33: #{resnet_stem.1} parent=31 // pred_check
          %p1003 = pneg %p130
        $region34: #{resnet_stem.1} parent=31 // pred_check_branch
          %1005 = sbr.rel (%p1003) target = $region36
        $region35: #{resnet_stem.1} parent=31 // pred_region
          %s1006 = smul.u32 4, %s22
          %s1008 = ssub.s32 512, 512
          %1009 = vsyncadd %s999, %s1008
          %s1010 = smul.addr %s21, 8
          %s1011 = sadd.s32 %s1006, %s1010
          %s1012 = smul.addr %s1011, 128
          %s1013 = scalar_lea.hbm %s3, %s1012
          %s1014 = sshll.u32 %s1002, 4
          %s1015 = int_to_ptr.vmem [resolvable:$true] %s1014
          %1020 = dma.vmem_to_hbm [thread:$0]  %s1015, 512, %s1013, %s999, 128, 128, 8
        $region36: #{resnet_stem.1} parent=31 // pred_fallthru
          _
      $region32: #{resnet_stem.1} parent=5 // pred_fallthru
        _
      %p1021 = scmp.le.s32.totalorder 2, %s12
      // Predicated region
      $region37: #{resnet_stem.1} parent=5 // pred_check
        %p1022 = pneg %p1021
      $region38: #{resnet_stem.1} parent=5 // pred_check_branch
        %1024 = sbr.rel (%p1022) target = $region40
      $region39: #{resnet_stem.1} parent=5 // pred_region
        %s1025 = ssub.s32 %s12, 2
        // Predicated region
        $region41: #{resnet_stem.1} parent=39 // pred_check
          %p1026 = pneg %p136
        $region42: #{resnet_stem.1} parent=39 // pred_check_branch
          %1028 = sbr.rel (%p1026) target = $region44
        $region43: #{resnet_stem.1} parent=39 // pred_region
          %s1029 = sand.u32 %s121, 1
          %s1030 = scalar_lea.sflag [#allocation5], %s1029
          %s1031 = sand.u32 %s121, 1
          %s1032 = smul.addr %s1031, 32
          %s1033 = scalar_lea.vmem [#allocation4], %s1032
          %1034 = dma.done %s1030, 512
        $region44: #{resnet_stem.1} parent=39 // pred_fallthru
          _
      $region40: #{resnet_stem.1} parent=5 // pred_fallthru
        _
    $region6: #{resnet_stem.1} parent=1 // loop_footer
      %s16 = sadd.s32 1, %s12
    $region7: #{resnet_stem.1} parent=1 // loop_footer_branch
      %11 = sbr.rel target = $region3
    $region8: #{resnet_stem.1} parent=1 // loop_exit
      _
    %1035 = vsyncpa [#allocation5], 1
    %s1036 = scalar_lea.sflag [#allocation5], 1
    %1037 = vsyncpa %s1036, 1

</llo_original>
